<compile_context>
chip_gen: v7x
topology: tpu7x:2x2x1
jax: 0.10.0
libtpu: 0.0.40
codegen_flags: <defaults>
</compile_context>

<pallas_src>
import jax
import jax.numpy as jnp
from jax.experimental import pallas as pl
from jax.experimental.pallas import tpu as pltpu


# --------------------------------------------------------------------------
# Pallas kernel: fused (patches @ Wf) + bias + ReLU for one row tile.
# --------------------------------------------------------------------------
def _fused_conv_relu_kernel(p_ref, w_ref, b_ref, o_ref):
    # p_ref: [TM, Kc]     bf16 patch tile (Kc = Kmax*Kmax*Cin)
    # w_ref: [Kc, Fout]   bf16 fused weights (Fout = n_scales * F), resident
    # b_ref: [1,  Fout]   f32 fused bias, resident
    # o_ref: [TM, Fout]   output tile (lane-dense, Fout multiple of 128)
    acc = jnp.dot(p_ref[...], w_ref[...],
                  preferred_element_type=jnp.float32)        # single MXU dot
    acc = acc + b_ref[...]                                    # f32 epilogue
    o_ref[...] = jnp.maximum(acc, 0.0).astype(o_ref.dtype)    # fused ReLU


def _choose_row_tile(rows, cap):
    """Largest tile <= cap (power-of-two halving) keeping >= 2 grid steps.

    Keeping >= 2 steps matters on v7x: the single 'parallel' grid axis is what
    feeds the second TensorCore; a 1-step grid would leave one TC idle.
    """
    tm = cap
    while tm > 128 and pl.cdiv(rows, tm) < 2:
        tm //= 2
    return tm


def _fused_matmul_bias_relu(patches_bf16, w_fused_bf16, b_fused_f32, tm,
                            out_dtype=jnp.float32, patch_buffers=2):
    """pallas_call wrapper: rows tiled by `tm`, full contraction / full Fout."""
    rows, kc = patches_bf16.shape
    fout = w_fused_bf16.shape[1]
    assert rows % tm == 0

    # Patch input spec: only request non-default buffering when asked (per
    # review: raise to 3 only if xprof shows exposed input DMA).
    if patch_buffers == 2:
        patch_spec = pl.BlockSpec((tm, kc), lambda i: (i, 0))
    else:
        patch_spec = pl.BlockSpec((tm, kc), lambda i: (i, 0),
                                  pipeline_mode=pl.Buffered(patch_buffers))

    return pl.pallas_call(
        _fused_conv_relu_kernel,
        out_shape=jax.ShapeDtypeStruct((rows, fout), out_dtype),
        grid_spec=pltpu.PrefetchScalarGridSpec(
            num_scalar_prefetch=0,
            grid=(rows // tm,),
            in_specs=[
                patch_spec,                                     # patch row tile
                pl.BlockSpec((kc, fout), lambda i: (0, 0)),     # weights (resident)
                pl.BlockSpec((1, fout), lambda i: (0, 0)),      # bias (resident)
            ],
            out_specs=pl.BlockSpec((tm, fout), lambda i: (i, 0)),
        ),
        compiler_params=pltpu.CompilerParams(
            dimension_semantics=("parallel",),                  # megacore on v7x
        ),
    )(patches_bf16, w_fused_bf16, b_fused_f32)


# --------------------------------------------------------------------------
# JAX wrapper: layout plumbing (pad once, bf16 im2col, fuse weights, NCHW I/O).
# --------------------------------------------------------------------------
def onelayer_net_forward(x_nchw, params, scales, *, row_tile_cap=2048,
                         out_dtype=jnp.float32, patch_buffers=2):
    """Matches Onelayer_Net.forward: per-scale 'same' conv -> ReLU -> concat(C)."""
    assert all(k % 2 == 1 for k in scales), "'same' pad = K//2 requires odd K"
    n, cin, h, w = x_nchw.shape
    f = params[0][0].shape[-1]
    kmax = max(scales)
    pad = kmax // 2
    kc = kmax * kmax * cin
    fout = len(scales) * f

    # NCHW -> NHWC, cast to bf16 BEFORE im2col (halves the Kmax^2-expanded
    # HBM intermediate), pad ONCE to the largest halo.
    x_nhwc = jnp.transpose(x_nchw, (0, 2, 3, 1)).astype(jnp.bfloat16)
    xp = jnp.pad(x_nhwc, ((0, 0), (pad, pad), (pad, pad), (0, 0)))

    # im2col in XLA: [N*H*W, Kmax*Kmax*Cin], tap order (kh, kw) major, cin minor.
    taps = []
    for kh in range(kmax):
        for kw in range(kmax):
            taps.append(xp[:, kh:kh + h, kw:kw + w, :])          # [N,H,W,Cin] bf16
    patches = jnp.stack(taps, axis=3).reshape(n * h * w, kc)     # bf16 throughout

    # Adaptive row tile: big (near-roofline, few pipeline steps) but capped so
    # the per-step footprint fits v5e's 16 MiB scoped-VMEM default, and >= 2
    # grid steps remain for v7x megacore.
    rows = n * h * w
    tm = _choose_row_tile(rows, row_tile_cap)
    rows_pad = pl.cdiv(rows, tm) * tm
    if rows_pad != rows:
        patches = jnp.pad(patches, ((0, rows_pad - rows), (0, 0)))

    # Fuse all scales into one [Kc, n_scales*F] weight matrix (zero-embedded)
    # and one [1, n_scales*F] bias (per-channel bias/ReLU stays exact).
    w_cols, b_cols = [], []
    for (wk, bk), k in zip(params, scales):
        off = (kmax - k) // 2
        wk_pad = jnp.pad(wk, ((off, off), (off, off), (0, 0), (0, 0)))  # HWIO
        w_cols.append(wk_pad.reshape(kc, f))
        b_cols.append(bk)
    w_fused = jnp.concatenate(w_cols, axis=1).astype(jnp.bfloat16)      # [Kc, Fout]
    b_fused = jnp.concatenate(b_cols).reshape(1, fout).astype(jnp.float32)

    # One kernel, one matmul, lane-dense 2D output.
    out2d = _fused_matmul_bias_relu(patches, w_fused, b_fused, tm,
                                    out_dtype=out_dtype,
                                    patch_buffers=patch_buffers)

    # Layout plumbing back to NCHW (channel order == torch.cat order).
    out = out2d[:rows].reshape(n, h, w, fout)
    return jnp.transpose(out, (0, 3, 1, 2))                     # [N, S*F, H, W]


def init_params(key, scales, nc, n_feature_maps):
    """Deterministic PyTorch-style Conv2d init (uniform +-1/sqrt(fan_in)), HWIO."""
    params = []
    for i, k in enumerate(scales):
        kw_key, kb_key = jax.random.split(jax.random.fold_in(key, i))
        fan_in = nc * k * k
        bound = 1.0 / jnp.sqrt(jnp.float32(fan_in))
        wk = jax.random.uniform(kw_key, (k, k, nc, n_feature_maps),
                                jnp.float32, -bound, bound)
        bk = jax.random.uniform(kb_key, (n_feature_maps,),
                                jnp.float32, -bound, bound)
        params.append((wk, bk))
    return params


if __name__ == "__main__":
    # Small shapes consistent with the module (nc=3 is fixed by the model;
    # n_feature_maps=128 as in the spec; a subset of the spec's scales).
    N, NC, H, W = 2, 3, 16, 16
    scales = [3, 5, 7]
    n_feature_maps = 128

    key = jax.random.PRNGKey(0)
    xkey, pkey = jax.random.split(key)
    x = jax.random.normal(xkey, (N, NC, H, W), jnp.float32)
    params = init_params(pkey, scales, NC, n_feature_maps)

    fwd = jax.jit(lambda xx: onelayer_net_forward(xx, params, scales))
    out = jax.block_until_ready(fwd(x))
    assert out.shape == (N, len(scales) * n_feature_maps, H, W), out.shape
    assert out.dtype == jnp.float32, out.dtype

    # Reference (XLA conv): same dtype recipe as the kernel when cast_bf16=True
    # (bf16 operands, f32 accumulation), full-f32 otherwise.
    def xla_ref(cast_bf16):
        refs = []
        for (wk, bk), k in zip(params, scales):
            lhs = x.astype(jnp.bfloat16) if cast_bf16 else x
            rhs = wk.astype(jnp.bfloat16) if cast_bf16 else wk
            r = jax.lax.conv_general_dilated(
                lhs, rhs, window_strides=(1, 1),
                padding=[(k // 2, k // 2)] * 2,
                dimension_numbers=("NCHW", "HWIO", "NCHW"),
                preferred_element_type=jnp.float32)
            refs.append(jnp.maximum(r + bk.reshape(1, -1, 1, 1), 0.0))
        return jnp.concatenate(refs, axis=1)

    ref_bf16 = xla_ref(cast_bf16=True)
    assert jnp.allclose(out, ref_bf16, atol=1e-3, rtol=1e-3), \
        float(jnp.max(jnp.abs(out - ref_bf16)))

    # Full-f32 conv reference, loose tolerance (covers bf16 input quantization).
    ref_f32 = xla_ref(cast_bf16=False)
    assert jnp.allclose(out, ref_f32, atol=3e-2, rtol=3e-2), \
        float(jnp.max(jnp.abs(out - ref_f32)))

    print("KERNEL_OK")
</pallas_src>

<mosaic_0001>
module attributes {stable_mosaic.version = 11 : i64} {
  func.func @_fused_conv_relu_kernel(%arg0: i32, %arg1: memref<256x147xbf16, #tpu.memory_space<vmem>>, %arg2: memref<147x384xbf16, #tpu.memory_space<vmem>>, %arg3: memref<1x384xf32, #tpu.memory_space<vmem>>, %arg4: memref<256x384xf32, #tpu.memory_space<vmem>>) attributes {dimension_semantics = [#tpu.dimension_semantics<parallel>], iteration_bounds = array<i64: 2>, scalar_prefetch = 0 : i64, scratch_operands = 0 : i64, tpu.core_type = #tpu.core_type<tc>, window_params = [{transform_indices = @transform_0, window_bounds = array<i64: 256, 147>}, {pipeline_mode = #tpu.pipeline_mode<synchronous>, transform_indices = @transform_1, window_bounds = array<i64: 147, 384>}, {pipeline_mode = #tpu.pipeline_mode<synchronous>, transform_indices = @transform_2, window_bounds = array<i64: 1, 384>}, {transform_indices = @transform_3, window_bounds = array<i64: 256, 384>}]} {
    %c0 = arith.constant 0 : index
    %c0_0 = arith.constant 0 : index
    %0 = vector.load %arg1[%c0, %c0_0] : memref<256x147xbf16, #tpu.memory_space<vmem>>, vector<256x147xbf16>
    %c0_1 = arith.constant 0 : index
    %c0_2 = arith.constant 0 : index
    %1 = vector.load %arg2[%c0_1, %c0_2] : memref<147x384xbf16, #tpu.memory_space<vmem>>, vector<147x384xbf16>
    %cst = arith.constant dense<0.000000e+00> : vector<256x384xf32>
    %2 = tpu.matmul %0, %1, %cst {dimension_numbers = #tpu.dot_dimension_numbers<[1], [0], [0], [1], [0, 0, 1, 1], [], []>} : vector<256x147xbf16>, vector<147x384xbf16>, vector<256x384xf32> -> vector<256x384xf32>
    %c0_3 = arith.constant 0 : index
    %c0_4 = arith.constant 0 : index
    %3 = vector.load %arg3[%c0_3, %c0_4] : memref<1x384xf32, #tpu.memory_space<vmem>>, vector<1x384xf32>
    %4 = vector.broadcast %3 : vector<1x384xf32> to vector<256x384xf32>
    %5 = arith.addf %2, %4 : vector<256x384xf32>
    %cst_5 = arith.constant 0.000000e+00 : f32
    %6 = vector.broadcast %cst_5 : f32 to vector<256x384xf32>
    %7 = arith.maximumf %5, %6 : vector<256x384xf32>
    %c0_6 = arith.constant 0 : index
    %c0_7 = arith.constant 0 : index
    %8 = vector.load %arg4[%c0_6, %c0_7] : memref<256x384xf32, #tpu.memory_space<vmem>>, vector<256x384xf32>
    tpu.vector_store %arg4[%c0_6, %c0_7], %7 {strides = array<i32>} : memref<256x384xf32, #tpu.memory_space<vmem>>, vector<256x384xf32>,
    return
  }
  func.func @transform_0(%arg0: i32) -> (i32, i32) {
    %c0_i32 = arith.constant 0 : i32
    %c0_i32_0 = arith.constant 0 : i32
    return %arg0, %c0_i32 : i32, i32
  }
  func.func @transform_1(%arg0: i32) -> (i32, i32) {
    %c0_i32 = arith.constant 0 : i32
    %c0_i32_0 = arith.constant 0 : i32
    %c0_i32_1 = arith.constant 0 : i32
    return %c0_i32, %c0_i32_0 : i32, i32
  }
  func.func @transform_2(%arg0: i32) -> (i32, i32) {
    %c0_i32 = arith.constant 0 : i32
    %c0_i32_0 = arith.constant 0 : i32
    %c0_i32_1 = arith.constant 0 : i32
    return %c0_i32, %c0_i32_0 : i32, i32
  }
  func.func @transform_3(%arg0: i32) -> (i32, i32) {
    %c0_i32 = arith.constant 0 : i32
    %c0_i32_0 = arith.constant 0 : i32
    return %arg0, %c0_i32 : i32, i32
  }
}

</mosaic_0001>

<llo_original>
// kernel: _lambda_.1
$region0: #{_lambda_.1}
  #allocation0 [shape = 'u32[]', space=smem, size = 0x4, offset = 0x4, fixed_abs, tag = 'smem constant byte address 0x4 - core index']
  #allocation1 [shape = 'u32[144,128]{1,0:T(1,128)}', space=vmem, size = 0x12000, scoped, tag = 'internal scratch']
  %s0 = inlined_call_operand.vmem [shape: bf16[512,147], index: 0, kind: input, shape index: {}]
  %s1 = inlined_call_operand.vmem [shape: bf16[147,384], index: 1, kind: input, shape index: {}]
  %s2 = inlined_call_operand.vmem [shape: f32[1,384], index: 2, kind: input, shape index: {}]
  %s3 = inlined_call_operand.hbm [shape: f32[512,384], index: 3, kind: output, shape index: {}]
  %s4 = sld [smem:[#allocation0]]
  $region45: #{_lambda_.1} parent=0
    _
  %s6 = ssub.s32 1, %s4
  %s7 = scalar_select 0, %s6, %s4
  $region1: #{_lambda_.1} parent=0
    #allocation2 [shape = 'u8[786432]{0}', space=vmem, size = 0xc0000, scoped, tag = 'output window, operand 0']
    #allocation3 [shape = 's32[2]{0}', space=sflag, size = 0x8, scoped, tag = 'scoped memory for _lambda_.1']
    %8 = vsyncpa [#allocation3], 0
    %s9 = scalar_lea.sflag [#allocation3], 1
    %10 = vsyncpa %s9, 0
    loop: start=0, step=1, limit=4
    $region2: #{_lambda_.1} parent=1 // loop_pre_header
      _
    $region3: #{_lambda_.1} parent=1 // loop_header
      %s12 = sphi 0, %s16
      %p13 = scmp.ge.s32.totalorder %s12, 4
      %s22 = sphi 0, %s24
      %s25 = sphi 0, %s22
      %s26 = sphi 0, %s25
      %s42 = sphi 0, %s26
      %s46 = sphi 0, %s46
      %s48 = sphi 0, %s46
      %s49 = sphi 0, %s48
      %s63 = sphi 0, %s49
      %s67 = sphi 0, %s67
      %s69 = sphi 0, %s67
      %s70 = sphi 0, %s69
      %s84 = sphi 0, %s70
      %s90 = sphi 0, %s92
      %s93 = sphi 0, %s90
      %s94 = sphi 0, %s93
      %s110 = sphi 0, %s94
    $region4: #{_lambda_.1} parent=1 // loop_header_branch
      %15 = sbr.rel (%p13) target = $region8
    $region5: #{_lambda_.1} parent=1 // loop_body
      %s17 = ssub.s32 %s12, 1
      %s18 = ssub.s32 %s12, 2
      %s19 = sadd.s32 %s12, 1
      %s20 = ssub.s32 %s12, %s19
      %p21 = scmp.eq.s32.totalorder %s20, 0
      %s23 = sadd.s32 %s22, 1
      %s24 = scalar_select %p21, %s22, %s23
      %p27 = pneg %p21
      %p28 = scmp.eq.s32.totalorder %s12, 1
      %p29 = por %p27, %p28
      %p30 = scmp.ne.s32.totalorder %s22, %s25
      %p31 = scmp.eq.s32.totalorder %s12, 0
      %p32 = por %p30, %p31
      %p33 = scmp.ne.s32.totalorder %s22, %s25
      %p34 = scmp.eq.s32.totalorder %s17, 1
      %p35 = por %p33, %p34
      %p36 = scmp.ne.s32.totalorder %s25, %s26
      %p37 = scmp.eq.s32.totalorder %s17, 0
      %p38 = por %p36, %p37
      %p39 = scmp.ne.s32.totalorder %s25, %s26
      %p40 = scmp.eq.s32.totalorder %s18, 1
      %p41 = por %p39, %p40
      %p43 = scmp.ne.s32.totalorder %s26, %s42
      %p44 = scmp.eq.s32.totalorder %s18, 0
      %p45 = por %p43, %p44
      %s47 = sadd.s32 %s46, 1
      %p50 = scmp.eq.s32.totalorder %s12, 1
      %p51 = scmp.ne.s32.totalorder %s46, %s48
      %p52 = scmp.eq.s32.totalorder %s12, 0
      %p53 = por %p51, %p52
      %p54 = scmp.ne.s32.totalorder %s46, %s48
      %p55 = scmp.eq.s32.totalorder %s17, 1
      %p56 = por %p54, %p55
      %p57 = scmp.ne.s32.totalorder %s48, %s49
      %p58 = scmp.eq.s32.totalorder %s17, 0
      %p59 = por %p57, %p58
      %p60 = scmp.ne.s32.totalorder %s48, %s49
      %p61 = scmp.eq.s32.totalorder %s18, 1
      %p62 = por %p60, %p61
      %p64 = scmp.ne.s32.totalorder %s49, %s63
      %p65 = scmp.eq.s32.totalorder %s18, 0
      %p66 = por %p64, %p65
      %s68 = sadd.s32 %s67, 1
      %p71 = scmp.eq.s32.totalorder %s12, 1
      %p72 = scmp.ne.s32.totalorder %s67, %s69
      %p73 = scmp.eq.s32.totalorder %s12, 0
      %p74 = por %p72, %p73
      %p75 = scmp.ne.s32.totalorder %s67, %s69
      %p76 = scmp.eq.s32.totalorder %s17, 1
      %p77 = por %p75, %p76
      %p78 = scmp.ne.s32.totalorder %s69, %s70
      %p79 = scmp.eq.s32.totalorder %s17, 0
      %p80 = por %p78, %p79
      %p81 = scmp.ne.s32.totalorder %s69, %s70
      %p82 = scmp.eq.s32.totalorder %s18, 1
      %p83 = por %p81, %p82
      %p85 = scmp.ne.s32.totalorder %s70, %s84
      %p86 = scmp.eq.s32.totalorder %s18, 0
      %p87 = por %p85, %p86
      %s88 = ssub.s32 %s12, %s19
      %p89 = scmp.eq.s32.totalorder %s88, 0
      %s91 = sadd.s32 %s90, 1
      %s92 = scalar_select %p89, %s90, %s91
      %p95 = pneg %p89
      %p96 = scmp.eq.s32.totalorder %s12, 1
      %p97 = por %p95, %p96
      %p98 = scmp.ne.s32.totalorder %s90, %s93
      %p99 = scmp.eq.s32.totalorder %s12, 0
      %p100 = por %p98, %p99
      %p101 = scmp.ne.s32.totalorder %s90, %s93
      %p102 = scmp.eq.s32.totalorder %s17, 1
      %p103 = por %p101, %p102
      %p104 = scmp.ne.s32.totalorder %s93, %s94
      %p105 = scmp.eq.s32.totalorder %s17, 0
      %p106 = por %p104, %p105
      %p107 = scmp.ne.s32.totalorder %s93, %s94
      %p108 = scmp.eq.s32.totalorder %s18, 1
      %p109 = por %p107, %p108
      %p111 = scmp.ne.s32.totalorder %s94, %s110
      %p112 = scmp.eq.s32.totalorder %s18, 0
      %p113 = por %p111, %p112
      %p114 = scmp.le.s32.totalorder 1, %s12
      %p115 = scmp.lt.s32.totalorder %s12, 3
      %p116 = pnand %p114, %p115
      %p117 = pneg %p116
      // Predicated region
      $region9: #{_lambda_.1} parent=5 // pred_check
        _
      $region10: #{_lambda_.1} parent=5 // pred_check_branch
        %119 = sbr.rel (%p116) target = $region12
      $region11: #{_lambda_.1} parent=5 // pred_region
        %s120 = ssub.s32 %s12, 1
        // Predicated region
        $region13: #{_lambda_.1} parent=11 // pred_check
          %p121 = pneg %p59
        $region14: #{_lambda_.1} parent=11 // pred_check_branch
          %123 = sbr.rel (%p121) target = $region16
        $region15: #{_lambda_.1} parent=11 // pred_region
          _
        $region16: #{_lambda_.1} parent=11 // pred_fallthru
          _
        // Predicated region
        $region17: #{_lambda_.1} parent=11 // pred_check
          %p124 = pneg %p80
        $region18: #{_lambda_.1} parent=11 // pred_check_branch
          %126 = sbr.rel (%p124) target = $region20
        $region19: #{_lambda_.1} parent=11 // pred_region
          _
        $region20: #{_lambda_.1} parent=11 // pred_fallthru
          _
      $region12: #{_lambda_.1} parent=5 // pred_fallthru
        _
      %p127 = scmp.lt.s32.totalorder %s12, 2
      // Predicated region
      $region21: #{_lambda_.1} parent=5 // pred_check
        %p128 = pneg %p127
      $region22: #{_lambda_.1} parent=5 // pred_check_branch
        %130 = sbr.rel (%p128) target = $region24
      $region23: #{_lambda_.1} parent=5 // pred_region
        // Predicated region
        $region25: #{_lambda_.1} parent=23 // pred_check
          %p131 = pneg %p32
        $region26: #{_lambda_.1} parent=23 // pred_check_branch
          %133 = sbr.rel (%p131) target = $region28
        $region27: #{_lambda_.1} parent=23 // pred_region
          %s134 = smul.u32 32, %s12
          %p135 = scmp.lt.s32.totalorder %s134, 63
          %s136 = scalar_select %p135, %s134, 63
          %s137 = smul.addr %s136, 2
          %s138 = smul.addr %s137, 4
          %s139 = scalar_lea.vmem %s0, %s138
          %s140 = smul.u32 32, %s12
        $region28: #{_lambda_.1} parent=23 // pred_fallthru
          _
      $region24: #{_lambda_.1} parent=5 // pred_fallthru
        _
      %p141 = scmp.le.s32.totalorder 1, %s12
      %p142 = scmp.lt.s32.totalorder %s12, 3
      %p143 = pnand %p141, %p142
      %p144 = pneg %p143
      // Predicated region
      $region29: #{_lambda_.1} parent=5 // pred_check
        _
      $region30: #{_lambda_.1} parent=5 // pred_check_branch
        %146 = sbr.rel (%p143) target = $region32
      $region31: #{_lambda_.1} parent=5 // pred_region
        %s147 = ssub.s32 %s12, 1
        %s148 = smul.u32 32, %s17
        %p149 = scmp.lt.s32.totalorder %s148, 63
        %s150 = scalar_select %p149, %s148, 63
        %s151 = smul.addr %s150, 2
        %s152 = smul.addr %s151, 4
        %s153 = scalar_lea.vmem %s0, %s152
        %p154 = pneg %p38
        %p155 = pneg %p35
        %p156 = pneg %p59
        %p157 = pneg %p56
        %p158 = pneg %p80
        %p159 = pneg %p77
        %p160 = pneg %p106
        %p161 = pneg %p103
        %s162 = sand.u32 %s93, 1
        %s163 = scalar_lea.sflag [#allocation3], %s162
        %s164 = sand.u32 %s93, 1
        %s165 = smul.addr %s164, 768
        %s166 = scalar_lea.vmem [#allocation2], %s165
        %s167 = smul.u32 32, %s17
        %p168 = scmp.lt.s32.totalorder %s167, 63
        %s169 = scalar_select %p168, %s167, 63
        %s170 = smul.addr %s169, 2
        %s171 = smul.addr %s170, 4
        %s172 = scalar_lea.vmem %s0, %s171
        %s173 = smul.u32 32, %s17
        %s174 = smul.u32 32, %s17
        %v176 = vld [vmem:[%s172] sm:$0xff]
        %v177 = vld [vmem:[%s172 + $0x8] sm:$0xff]
        %v178 = vld [vmem:[%s172 + $0x10] sm:$0xff]
        %v179 = vld [vmem:[%s172 + $0x18] sm:$0xff]
        %v180 = vld [vmem:[%s172 + $0x20] sm:$0xff]
        %v181 = vld [vmem:[%s172 + $0x28] sm:$0xff]
        %v182 = vld [vmem:[%s172 + $0x30] sm:$0xff]
        %v183 = vld [vmem:[%s172 + $0x38] sm:$0xff]
        %v184 = vld [vmem:[%s172 + $0x40] sm:$0xff]
        %v185 = vld [vmem:[%s172 + $0x48] sm:$0xff]
        %v186 = vld [vmem:[%s172 + $0x50] sm:$0xff]
        %v187 = vld [vmem:[%s172 + $0x58] sm:$0xff]
        %v188 = vld [vmem:[%s172 + $0x60] sm:$0xff]
        %v189 = vld [vmem:[%s172 + $0x68] sm:$0xff]
        %v190 = vld [vmem:[%s172 + $0x70] sm:$0xff]
        %v191 = vld [vmem:[%s172 + $0x78] sm:$0xff]
        %v192 = vld [vmem:[%s172 + $0x80] sm:$0xff]
        %v193 = vld [vmem:[%s172 + $0x88] sm:$0xff]
        %v194 = vld [vmem:[%s172 + $0x90] sm:$0xff]
        %v195 = vld [vmem:[%s172 + $0x98] sm:$0xff]
        %v196 = vld [vmem:[%s172 + $0xa0] sm:$0xff]
        %v197 = vld [vmem:[%s172 + $0xa8] sm:$0xff]
        %v198 = vld [vmem:[%s172 + $0xb0] sm:$0xff]
        %v199 = vld [vmem:[%s172 + $0xb8] sm:$0xff]
        %v200 = vld [vmem:[%s172 + $0xc0] sm:$0xff]
        %v201 = vld [vmem:[%s172 + $0xc8] sm:$0xff]
        %v202 = vld [vmem:[%s172 + $0xd0] sm:$0xff]
        %v203 = vld [vmem:[%s172 + $0xd8] sm:$0xff]
        %v204 = vld [vmem:[%s172 + $0xe0] sm:$0xff]
        %v205 = vld [vmem:[%s172 + $0xe8] sm:$0xff]
        %v206 = vld [vmem:[%s172 + $0xf0] sm:$0xff]
        %v207 = vld [vmem:[%s172 + $0xf8] sm:$0xff]
        %v208 = vld [vmem:[%s1] sm:$0xff]
        %v209 = vld [vmem:[%s1 + $0x8] sm:$0xf]
        %v210 = vld [vmem:[%s1 + $0xc] sm:$0xff]
        %v211 = vld [vmem:[%s1 + $0x14] sm:$0xf]
        %v212 = vld [vmem:[%s1 + $0x18] sm:$0xff]
        %v213 = vld [vmem:[%s1 + $0x20] sm:$0xf]
        %v214 = vld [vmem:[%s1 + $0x24] sm:$0xff]
        %v215 = vld [vmem:[%s1 + $0x2c] sm:$0xf]
        %v216 = vld [vmem:[%s1 + $0x30] sm:$0xff]
        %v217 = vld [vmem:[%s1 + $0x38] sm:$0xf]
        %v218 = vld [vmem:[%s1 + $0x3c] sm:$0xff]
        %v219 = vld [vmem:[%s1 + $0x44] sm:$0xf]
        %v220 = vld [vmem:[%s1 + $0x48] sm:$0xff]
        %v221 = vld [vmem:[%s1 + $0x50] sm:$0xf]
        %v222 = vld [vmem:[%s1 + $0x54] sm:$0xff]
        %v223 = vld [vmem:[%s1 + $0x5c] sm:$0xf]
        %v224 = vld [vmem:[%s1 + $0x60] sm:$0xff]
        %v225 = vld [vmem:[%s1 + $0x68] sm:$0xf]
        %v226 = vld [vmem:[%s1 + $0x6c] sm:$0xff]
        %v227 = vld [vmem:[%s1 + $0x74] sm:$0xf]
        %v228 = vld [vmem:[%s1 + $0x78] sm:$0xff]
        %v229 = vld [vmem:[%s1 + $0x80] sm:$0xf]
        %v230 = vld [vmem:[%s1 + $0x84] sm:$0xff]
        %v231 = vld [vmem:[%s1 + $0x8c] sm:$0xf]
        %v232 = vld [vmem:[%s1 + $0x90] sm:$0xff]
        %v233 = vld [vmem:[%s1 + $0x98] sm:$0xf]
        %v234 = vld [vmem:[%s1 + $0x9c] sm:$0xff]
        %v235 = vld [vmem:[%s1 + $0xa4] sm:$0xf]
        %v236 = vld [vmem:[%s1 + $0xa8] sm:$0xff]
        %v237 = vld [vmem:[%s1 + $0xb0] sm:$0xf]
        %v238 = vld [vmem:[%s1 + $0xb4] sm:$0xff]
        %v239 = vld [vmem:[%s1 + $0xbc] sm:$0xf]
        %v240 = vld [vmem:[%s1 + $0xc0] sm:$0xff]
        %v241 = vld [vmem:[%s1 + $0xc8] sm:$0xf]
        %v242 = vld [vmem:[%s1 + $0xcc] sm:$0xff]
        %v243 = vld [vmem:[%s1 + $0xd4] sm:$0xf]
        %v244 = vld [vmem:[%s1 + $0xd8] sm:$0x33]
        %v245 = vld [vmem:[%s1 + $0xe0] sm:$0x3]
        %v246 = vld [vmem:[%s2] sm:$0x7]
        %v248 = vlaneseq
        %v249 = vshrl.u32 %v248, 7
        %v250 = vsub.s32 0, %v249
        %v251 = vrot.slane %v246, %v250
        %v252 = vlaneseq
        %v253 = vshrl.u32 %v252, 7
        %v254 = vsub.s32 1, %v253
        %v255 = vrot.slane %v246, %v254
        %v256 = vlaneseq
        %v257 = vshrl.u32 %v256, 7
        %v258 = vsub.s32 2, %v257
        %v259 = vrot.slane %v246, %v258
        %v295 = vunpack.c.l.b16 %v176
        %v296 = vunpack.c.h.b16 %v176
        %v297 = vunpack.c.l.b16 %v177
        %v298 = vunpack.c.h.b16 %v177
        %v299 = vunpack.c.l.b16 %v178
        %v300 = vunpack.c.h.b16 %v178
        %v301 = vunpack.c.l.b16 %v179
        %v302 = vunpack.c.h.b16 %v179
        %v303 = vunpack.c.l.b16 %v180
        %v304 = vunpack.c.h.b16 %v180
        %v305 = vunpack.c.l.b16 %v181
        %v306 = vunpack.c.h.b16 %v181
        %v307 = vunpack.c.l.b16 %v182
        %v308 = vunpack.c.h.b16 %v182
        %v309 = vunpack.c.l.b16 %v183
        %v310 = vunpack.c.h.b16 %v183
        %v311 = vunpack.c.l.b16 %v184
        %v312 = vunpack.c.h.b16 %v184
        %v313 = vunpack.c.l.b16 %v185
        %v314 = vunpack.c.h.b16 %v185
        %v315 = vunpack.c.l.b16 %v186
        %v316 = vunpack.c.h.b16 %v186
        %v317 = vunpack.c.l.b16 %v187
        %v318 = vunpack.c.h.b16 %v187
        %v319 = vunpack.c.l.b16 %v188
        %v320 = vunpack.c.h.b16 %v188
        %v321 = vunpack.c.l.b16 %v189
        %v322 = vunpack.c.h.b16 %v189
        %v323 = vunpack.c.l.b16 %v190
        %v324 = vunpack.c.h.b16 %v190
        %v325 = vunpack.c.l.b16 %v191
        %v326 = vunpack.c.h.b16 %v191
        %v327 = vunpack.c.l.b16 %v192
        %v328 = vunpack.c.h.b16 %v192
        %v329 = vunpack.c.l.b16 %v193
        %v330 = vunpack.c.h.b16 %v193
        %v331 = vunpack.c.l.b16 %v194
        %v332 = vunpack.c.h.b16 %v194
        %v333 = vunpack.c.l.b16 %v195
        %v334 = vunpack.c.h.b16 %v195
        %v335 = vunpack.c.l.b16 %v196
        %v336 = vunpack.c.h.b16 %v196
        %v337 = vunpack.c.l.b16 %v197
        %v338 = vunpack.c.h.b16 %v197
        %v339 = vunpack.c.l.b16 %v198
        %v340 = vunpack.c.h.b16 %v198
        %v341 = vunpack.c.l.b16 %v199
        %v342 = vunpack.c.h.b16 %v199
        %v343 = vunpack.c.l.b16 %v200
        %v344 = vunpack.c.h.b16 %v200
        %v345 = vunpack.c.l.b16 %v201
        %v346 = vunpack.c.h.b16 %v201
        %v347 = vunpack.c.l.b16 %v202
        %v348 = vunpack.c.h.b16 %v202
        %v349 = vunpack.c.l.b16 %v203
        %v350 = vunpack.c.h.b16 %v203
        %v351 = vunpack.c.l.b16 %v204
        %v352 = vunpack.c.h.b16 %v204
        %v353 = vunpack.c.l.b16 %v205
        %v354 = vunpack.c.h.b16 %v205
        %v355 = vunpack.c.l.b16 %v206
        %v356 = vunpack.c.h.b16 %v206
        %v357 = vunpack.c.l.b16 %v207
        %v358 = vunpack.c.h.b16 %v207
        %v359 = vpack.c.b16 %v297, %v295
        %v360 = vpack.c.b16 %v298, %v296
        %v361 = vpack.c.b16 %v301, %v299
        %v362 = vpack.c.b16 %v302, %v300
        %v363 = vpack.c.b16 %v305, %v303
        %v364 = vpack.c.b16 %v306, %v304
        %v365 = vpack.c.b16 %v309, %v307
        %v366 = vpack.c.b16 %v310, %v308
        %v367 = vpack.c.b16 %v313, %v311
        %v368 = vpack.c.b16 %v314, %v312
        %v369 = vpack.c.b16 %v317, %v315
        %v370 = vpack.c.b16 %v318, %v316
        %v371 = vpack.c.b16 %v321, %v319
        %v372 = vpack.c.b16 %v322, %v320
        %v373 = vpack.c.b16 %v325, %v323
        %v374 = vpack.c.b16 %v326, %v324
        %v375 = vpack.c.b16 %v329, %v327
        %v376 = vpack.c.b16 %v330, %v328
        %v377 = vpack.c.b16 %v333, %v331
        %v378 = vpack.c.b16 %v334, %v332
        %v379 = vpack.c.b16 %v337, %v335
        %v380 = vpack.c.b16 %v338, %v336
        %v381 = vpack.c.b16 %v341, %v339
        %v382 = vpack.c.b16 %v342, %v340
        %v383 = vpack.c.b16 %v345, %v343
        %v384 = vpack.c.b16 %v346, %v344
        %v385 = vpack.c.b16 %v349, %v347
        %v386 = vpack.c.b16 %v350, %v348
        %v387 = vpack.c.b16 %v353, %v351
        %v388 = vpack.c.b16 %v354, %v352
        %v389 = vpack.c.b16 %v357, %v355
        %v390 = vpack.c.b16 %v358, %v356
        %v445 = vunpack.c.l.b16 %v208
        %v446 = vunpack.c.h.b16 %v208
        %v447 = vunpack.c.l.b16 %v209
        %v448 = vunpack.c.l.b16 %v210
        %v449 = vunpack.c.h.b16 %v210
        %v450 = vunpack.c.l.b16 %v211
        %v451 = vunpack.c.l.b16 %v212
        %v452 = vunpack.c.h.b16 %v212
        %v453 = vunpack.c.l.b16 %v213
        %v454 = vunpack.c.l.b16 %v214
        %v455 = vunpack.c.h.b16 %v214
        %v456 = vunpack.c.l.b16 %v215
        %v457 = vunpack.c.l.b16 %v216
        %v458 = vunpack.c.h.b16 %v216
        %v459 = vunpack.c.l.b16 %v217
        %v460 = vunpack.c.l.b16 %v218
        %v461 = vunpack.c.h.b16 %v218
        %v462 = vunpack.c.l.b16 %v219
        %v463 = vunpack.c.l.b16 %v220
        %v464 = vunpack.c.h.b16 %v220
        %v465 = vunpack.c.l.b16 %v221
        %v466 = vunpack.c.l.b16 %v222
        %v467 = vunpack.c.h.b16 %v222
        %v468 = vunpack.c.l.b16 %v223
        %v469 = vunpack.c.l.b16 %v224
        %v470 = vunpack.c.h.b16 %v224
        %v471 = vunpack.c.l.b16 %v225
        %v472 = vunpack.c.l.b16 %v226
        %v473 = vunpack.c.h.b16 %v226
        %v474 = vunpack.c.l.b16 %v227
        %v475 = vunpack.c.l.b16 %v228
        %v476 = vunpack.c.h.b16 %v228
        %v477 = vunpack.c.l.b16 %v229
        %v478 = vunpack.c.l.b16 %v230
        %v479 = vunpack.c.h.b16 %v230
        %v480 = vunpack.c.l.b16 %v231
        %v481 = vunpack.c.l.b16 %v232
        %v482 = vunpack.c.h.b16 %v232
        %v483 = vunpack.c.l.b16 %v233
        %v484 = vunpack.c.l.b16 %v234
        %v485 = vunpack.c.h.b16 %v234
        %v486 = vunpack.c.l.b16 %v235
        %v487 = vunpack.c.l.b16 %v236
        %v488 = vunpack.c.h.b16 %v236
        %v489 = vunpack.c.l.b16 %v237
        %v490 = vunpack.c.l.b16 %v238
        %v491 = vunpack.c.h.b16 %v238
        %v492 = vunpack.c.l.b16 %v239
        %v493 = vunpack.c.l.b16 %v240
        %v494 = vunpack.c.h.b16 %v240
        %v495 = vunpack.c.l.b16 %v241
        %v496 = vunpack.c.l.b16 %v242
        %v497 = vunpack.c.h.b16 %v242
        %v498 = vunpack.c.l.b16 %v243
        %v499 = vunpack.c.l.b16 %v244
        %v500 = vunpack.c.h.b16 %v244
        %v501 = vunpack.c.l.b16 %v245
        %v502 = vpack.c.b16 %v448, %v445
        %v503 = vpack.c.b16 %v449, %v446
        %v504 = vpack.c.b16 %v450, %v447
        %v505 = vpack.c.b16 %v454, %v451
        %v506 = vpack.c.b16 %v455, %v452
        %v507 = vpack.c.b16 %v456, %v453
        %v508 = vpack.c.b16 %v460, %v457
        %v509 = vpack.c.b16 %v461, %v458
        %v510 = vpack.c.b16 %v462, %v459
        %v511 = vpack.c.b16 %v466, %v463
        %v512 = vpack.c.b16 %v467, %v464
        %v513 = vpack.c.b16 %v468, %v465
        %v514 = vpack.c.b16 %v472, %v469
        %v515 = vpack.c.b16 %v473, %v470
        %v516 = vpack.c.b16 %v474, %v471
        %v517 = vpack.c.b16 %v478, %v475
        %v518 = vpack.c.b16 %v479, %v476
        %v519 = vpack.c.b16 %v480, %v477
        %v520 = vpack.c.b16 %v484, %v481
        %v521 = vpack.c.b16 %v485, %v482
        %v522 = vpack.c.b16 %v486, %v483
        %v523 = vpack.c.b16 %v490, %v487
        %v524 = vpack.c.b16 %v491, %v488
        %v525 = vpack.c.b16 %v492, %v489
        %v526 = vpack.c.b16 %v496, %v493
        %v527 = vpack.c.b16 %v497, %v494
        %v528 = vpack.c.b16 %v498, %v495
        %v529 = vpack.c.b16 %v499, %v499
        %v530 = vpack.c.b16 %v500, %v500
        %v531 = vpack.c.b16 %v501, %v501
        %vm559 = vcmask 154624
        %v561 = vsel %vm559, %v360, 0
        %v564 = vsel %vm559, %v362, 0
        %v567 = vsel %vm559, %v364, 0
        %v570 = vsel %vm559, %v366, 0
        %v573 = vsel %vm559, %v368, 0
        %v576 = vsel %vm559, %v370, 0
        %v579 = vsel %vm559, %v372, 0
        %v582 = vsel %vm559, %v374, 0
        %v585 = vsel %vm559, %v376, 0
        %v588 = vsel %vm559, %v378, 0
        %v591 = vsel %vm559, %v380, 0
        %v594 = vsel %vm559, %v382, 0
        %v597 = vsel %vm559, %v384, 0
        %v600 = vsel %vm559, %v386, 0
        %v603 = vsel %vm559, %v388, 0
        %v606 = vsel %vm559, %v390, 0
        %vm608 = vcmask 1040384
        %vm609 = vcmask 1041408
        %v610 = vsel %vm608, 4294967295, 65535
        %v611 = vsel %vm609, %v610, 0
        %v613 = vand.u32 %v529, %v611
        %v616 = vand.u32 %v530, %v611
        %v619 = vand.u32 %v531, %v611
        %621 = vmatprep.subr.bf16.mxu0 %v503
        %622 = vmatpush1.bf16.msra.mxu0 %v502
        %623 = vmatprep.subr.bf16.mxu0 %v506
        %624 = vmatpush1.bf16.msra.mxu0 %v505
        %625 = vmatprep.subr.bf16.mxu0 %v509
        %626 = vmatpush1.bf16.msra.mxu0 %v508
        %627 = vmatprep.subr.bf16.mxu0 %v512
        %628 = vmatpush1.bf16.msra.mxu0 %v511
        %629 = vmatprep.subr.bf16.mxu0 %v515
        %630 = vmatpush1.bf16.msra.mxu0 %v514
        %631 = vmatprep.subr.bf16.mxu0 %v518
        %632 = vmatpush1.bf16.msra.mxu0 %v517
        %633 = vmatprep.subr.bf16.mxu0 %v521
        %634 = vmatpush1.bf16.msra.mxu0 %v520
        %635 = vmatprep.subr.bf16.mxu0 %v524
        %636 = vmatpush1.bf16.msra.mxu0 %v523
        %637 = vmatprep.subr.bf16.mxu0 %v527
        %638 = vmatpush1.bf16.msra.mxu0 %v526
        %639 = vmatprep.subr.bf16.mxu0 %v616
        %640 = vmatpush1.bf16.msra.mxu0 %v613
        %641 = vmatprep.subr.bf16.mxu0 0
        %642 = vmatpush1.bf16.msra.mxu0 0
        %643 = vmatprep.subr.bf16.mxu0 0
        %644 = vmatpush1.bf16.msra.mxu0 0
        %645 = vmatprep.subr.bf16.mxu0 0
        %646 = vmatpush1.bf16.msra.mxu0 0
        %647 = vmatprep.subr.bf16.mxu0 0
        %648 = vmatpush1.bf16.msra.mxu0 0
        %649 = vmatprep.subr.bf16.mxu0 0
        %650 = vmatpush1.bf16.msra.mxu0 0
        %651 = vmatprep.subr.bf16.mxu0 0
        %652 = vmatpush1.bf16.msra.mxu0 0
        %653 = vmatprep.mubr.bf16.mxu0 %v561
        %654 = vmatmul.mubr.bf16.gmra.mrb[0].mxu0 %v359
        %v655 = vpop.f32.mrb[0].mxu0
        %v656 = vadd.f32 %v251, %v655
        %v657 = vpop.f32.mrb[0].mxu0
        %v658 = vadd.f32 %v255, %v657
        %v659 = vpop.f32.mrb[0].mxu0
        %v660 = vadd.f32 %v251, %v659
        %v661 = vpop.f32.mrb[0].mxu0
        %v662 = vadd.f32 %v255, %v661
        %663 = vmatprep.mubr.bf16.mxu0 %v564
        %664 = vmatmul.mubr.bf16.gmra.mrb[0].mxu0 %v361
        %v665 = vpop.f32.mrb[0].mxu0
        %v666 = vadd.f32 %v251, %v665
        %v667 = vpop.f32.mrb[0].mxu0
        %v668 = vadd.f32 %v255, %v667
        %v669 = vpop.f32.mrb[0].mxu0
        %v670 = vadd.f32 %v251, %v669
        %v671 = vpop.f32.mrb[0].mxu0
        %v672 = vadd.f32 %v255, %v671
        %673 = vmatprep.mubr.bf16.mxu0 %v567
        %674 = vmatmul.mubr.bf16.gmra.mrb[0].mxu0 %v363
        %v675 = vpop.f32.mrb[0].mxu0
        %v676 = vadd.f32 %v251, %v675
        %v677 = vpop.f32.mrb[0].mxu0
        %v678 = vadd.f32 %v255, %v677
        %v679 = vpop.f32.mrb[0].mxu0
        %v680 = vadd.f32 %v251, %v679
        %v681 = vpop.f32.mrb[0].mxu0
        %v682 = vadd.f32 %v255, %v681
        %683 = vmatprep.mubr.bf16.mxu0 %v570
        %684 = vmatmul.mubr.bf16.gmra.mrb[0].mxu0 %v365
        %v685 = vpop.f32.mrb[0].mxu0
        %v686 = vadd.f32 %v251, %v685
        %v687 = vpop.f32.mrb[0].mxu0
        %v688 = vadd.f32 %v255, %v687
        %v689 = vpop.f32.mrb[0].mxu0
        %v690 = vadd.f32 %v251, %v689
        %v691 = vpop.f32.mrb[0].mxu0
        %v692 = vadd.f32 %v255, %v691
        %693 = vmatprep.mubr.bf16.mxu0 %v573
        %694 = vmatmul.mubr.bf16.gmra.mrb[0].mxu0 %v367
        %v695 = vpop.f32.mrb[0].mxu0
        %v696 = vadd.f32 %v251, %v695
        %v697 = vpop.f32.mrb[0].mxu0
        %v698 = vadd.f32 %v255, %v697
        %v699 = vpop.f32.mrb[0].mxu0
        %v700 = vadd.f32 %v251, %v699
        %v701 = vpop.f32.mrb[0].mxu0
        %v702 = vadd.f32 %v255, %v701
        %703 = vmatprep.mubr.bf16.mxu0 %v576
        %704 = vmatmul.mubr.bf16.gmra.mrb[0].mxu0 %v369
        %v705 = vpop.f32.mrb[0].mxu0
        %v706 = vadd.f32 %v251, %v705
        %v707 = vpop.f32.mrb[0].mxu0
        %v708 = vadd.f32 %v255, %v707
        %v709 = vpop.f32.mrb[0].mxu0
        %v710 = vadd.f32 %v251, %v709
        %v711 = vpop.f32.mrb[0].mxu0
        %v712 = vadd.f32 %v255, %v711
        %713 = vmatprep.mubr.bf16.mxu0 %v579
        %714 = vmatmul.mubr.bf16.gmra.mrb[0].mxu0 %v371
        %v715 = vpop.f32.mrb[0].mxu0
        %v716 = vadd.f32 %v251, %v715
        %v717 = vpop.f32.mrb[0].mxu0
        %v718 = vadd.f32 %v255, %v717
        %v719 = vpop.f32.mrb[0].mxu0
        %v720 = vadd.f32 %v251, %v719
        %v721 = vpop.f32.mrb[0].mxu0
        %v722 = vadd.f32 %v255, %v721
        %723 = vmatprep.mubr.bf16.mxu0 %v582
        %724 = vmatmul.mubr.bf16.gmra.mrb[0].mxu0 %v373
        %v725 = vpop.f32.mrb[0].mxu0
        %v726 = vadd.f32 %v251, %v725
        %v727 = vpop.f32.mrb[0].mxu0
        %v728 = vadd.f32 %v255, %v727
        %v729 = vpop.f32.mrb[0].mxu0
        %v730 = vadd.f32 %v251, %v729
        %v731 = vpop.f32.mrb[0].mxu0
        %v732 = vadd.f32 %v255, %v731
        %733 = vmatprep.mubr.bf16.mxu0 %v585
        %734 = vmatmul.mubr.bf16.gmra.mrb[0].mxu0 %v375
        %v735 = vpop.f32.mrb[0].mxu0
        %v736 = vadd.f32 %v251, %v735
        %v737 = vpop.f32.mrb[0].mxu0
        %v738 = vadd.f32 %v255, %v737
        %v739 = vpop.f32.mrb[0].mxu0
        %v740 = vadd.f32 %v251, %v739
        %v741 = vpop.f32.mrb[0].mxu0
        %v742 = vadd.f32 %v255, %v741
        %743 = vmatprep.mubr.bf16.mxu0 %v588
        %744 = vmatmul.mubr.bf16.gmra.mrb[0].mxu0 %v377
        %v745 = vpop.f32.mrb[0].mxu0
        %v746 = vadd.f32 %v251, %v745
        %v747 = vpop.f32.mrb[0].mxu0
        %v748 = vadd.f32 %v255, %v747
        %v749 = vpop.f32.mrb[0].mxu0
        %v750 = vadd.f32 %v251, %v749
        %v751 = vpop.f32.mrb[0].mxu0
        %v752 = vadd.f32 %v255, %v751
        %753 = vmatprep.mubr.bf16.mxu0 %v591
        %754 = vmatmul.mubr.bf16.gmra.mrb[0].mxu0 %v379
        %v755 = vpop.f32.mrb[0].mxu0
        %v756 = vadd.f32 %v251, %v755
        %v757 = vpop.f32.mrb[0].mxu0
        %v758 = vadd.f32 %v255, %v757
        %v759 = vpop.f32.mrb[0].mxu0
        %v760 = vadd.f32 %v251, %v759
        %v761 = vpop.f32.mrb[0].mxu0
        %v762 = vadd.f32 %v255, %v761
        %763 = vmatprep.mubr.bf16.mxu0 %v594
        %764 = vmatmul.mubr.bf16.gmra.mrb[0].mxu0 %v381
        %v765 = vpop.f32.mrb[0].mxu0
        %v766 = vadd.f32 %v251, %v765
        %v767 = vpop.f32.mrb[0].mxu0
        %v768 = vadd.f32 %v255, %v767
        %v769 = vpop.f32.mrb[0].mxu0
        %v770 = vadd.f32 %v251, %v769
        %v771 = vpop.f32.mrb[0].mxu0
        %v772 = vadd.f32 %v255, %v771
        %773 = vmatprep.mubr.bf16.mxu0 %v597
        %774 = vmatmul.mubr.bf16.gmra.mrb[0].mxu0 %v383
        %v775 = vpop.f32.mrb[0].mxu0
        %v776 = vadd.f32 %v251, %v775
        %v777 = vpop.f32.mrb[0].mxu0
        %v778 = vadd.f32 %v255, %v777
        %v779 = vpop.f32.mrb[0].mxu0
        %v780 = vadd.f32 %v251, %v779
        %v781 = vpop.f32.mrb[0].mxu0
        %v782 = vadd.f32 %v255, %v781
        %783 = vmatprep.mubr.bf16.mxu0 %v600
        %784 = vmatmul.mubr.bf16.gmra.mrb[0].mxu0 %v385
        %v785 = vpop.f32.mrb[0].mxu0
        %v786 = vadd.f32 %v251, %v785
        %v787 = vpop.f32.mrb[0].mxu0
        %v788 = vadd.f32 %v255, %v787
        %v789 = vpop.f32.mrb[0].mxu0
        %v790 = vadd.f32 %v251, %v789
        %v791 = vpop.f32.mrb[0].mxu0
        %v792 = vadd.f32 %v255, %v791
        %793 = vmatprep.mubr.bf16.mxu0 %v603
        %794 = vmatmul.mubr.bf16.gmra.mrb[0].mxu0 %v387
        %v795 = vpop.f32.mrb[0].mxu0
        %v796 = vadd.f32 %v251, %v795
        %v797 = vpop.f32.mrb[0].mxu0
        %v798 = vadd.f32 %v255, %v797
        %v799 = vpop.f32.mrb[0].mxu0
        %v800 = vadd.f32 %v251, %v799
        %v801 = vpop.f32.mrb[0].mxu0
        %v802 = vadd.f32 %v255, %v801
        %803 = vmatprep.mubr.bf16.mxu0 %v606
        %804 = vmatmul.mubr.bf16.gmra.mrb[0].mxu0 %v389
        %v805 = vpop.f32.mrb[0].mxu0
        %v806 = vadd.f32 %v251, %v805
        %v807 = vpop.f32.mrb[0].mxu0
        %v808 = vadd.f32 %v255, %v807
        %v809 = vpop.f32.mrb[0].mxu0
        %v810 = vadd.f32 %v251, %v809
        %v811 = vpop.f32.mrb[0].mxu0
        %v812 = vadd.f32 %v255, %v811
        %813 = vdwg.mxu0
        %814 = vmatprep.subr.bf16.mxu0 0
        %815 = vmatpush1.bf16.msra.mxu0 %v504
        %816 = vmatprep.subr.bf16.mxu0 0
        %817 = vmatpush1.bf16.msra.mxu0 %v507
        %818 = vmatprep.subr.bf16.mxu0 0
        %819 = vmatpush1.bf16.msra.mxu0 %v510
        %820 = vmatprep.subr.bf16.mxu0 0
        %821 = vmatpush1.bf16.msra.mxu0 %v513
        %822 = vmatprep.subr.bf16.mxu0 0
        %823 = vmatpush1.bf16.msra.mxu0 %v516
        %824 = vmatprep.subr.bf16.mxu0 0
        %825 = vmatpush1.bf16.msra.mxu0 %v519
        %826 = vmatprep.subr.bf16.mxu0 0
        %827 = vmatpush1.bf16.msra.mxu0 %v522
        %828 = vmatprep.subr.bf16.mxu0 0
        %829 = vmatpush1.bf16.msra.mxu0 %v525
        %830 = vmatprep.subr.bf16.mxu0 0
        %831 = vmatpush1.bf16.msra.mxu0 %v528
        %832 = vmatprep.subr.bf16.mxu0 0
        %833 = vmatpush1.bf16.msra.mxu0 %v619
        %834 = vmatprep.subr.bf16.mxu0 0
        %835 = vmatpush1.bf16.msra.mxu0 0
        %836 = vmatprep.subr.bf16.mxu0 0
        %837 = vmatpush1.bf16.msra.mxu0 0
        %838 = vmatprep.subr.bf16.mxu0 0
        %839 = vmatpush1.bf16.msra.mxu0 0
        %840 = vmatprep.subr.bf16.mxu0 0
        %841 = vmatpush1.bf16.msra.mxu0 0
        %842 = vmatprep.subr.bf16.mxu0 0
        %843 = vmatpush1.bf16.msra.mxu0 0
        %844 = vmatprep.subr.bf16.mxu0 0
        %845 = vmatpush1.bf16.msra.mxu0 0
        %846 = vmatprep.mubr.bf16.mxu0 %v561
        %847 = vmatmul.mubr.bf16.gmra.mrb[0].mxu0 %v359
        %v848 = vpop.f32.mrb[0].mxu0
        %v849 = vadd.f32 %v259, %v848
        %v850 = vpop.f32.mrb[0].mxu0
        %v851 = vpop.f32.mrb[0].mxu0
        %v852 = vadd.f32 %v259, %v851
        %v853 = vpop.f32.mrb[0].mxu0
        %854 = vmatprep.mubr.bf16.mxu0 %v564
        %855 = vmatmul.mubr.bf16.gmra.mrb[0].mxu0 %v361
        %v856 = vpop.f32.mrb[0].mxu0
        %v857 = vadd.f32 %v259, %v856
        %v858 = vpop.f32.mrb[0].mxu0
        %v859 = vpop.f32.mrb[0].mxu0
        %v860 = vadd.f32 %v259, %v859
        %v861 = vpop.f32.mrb[0].mxu0
        %862 = vmatprep.mubr.bf16.mxu0 %v567
        %863 = vmatmul.mubr.bf16.gmra.mrb[0].mxu0 %v363
        %v864 = vpop.f32.mrb[0].mxu0
        %v865 = vadd.f32 %v259, %v864
        %v866 = vpop.f32.mrb[0].mxu0
        %v867 = vpop.f32.mrb[0].mxu0
        %v868 = vadd.f32 %v259, %v867
        %v869 = vpop.f32.mrb[0].mxu0
        %870 = vmatprep.mubr.bf16.mxu0 %v570
        %871 = vmatmul.mubr.bf16.gmra.mrb[0].mxu0 %v365
        %v872 = vpop.f32.mrb[0].mxu0
        %v873 = vadd.f32 %v259, %v872
        %v874 = vpop.f32.mrb[0].mxu0
        %v875 = vpop.f32.mrb[0].mxu0
        %v876 = vadd.f32 %v259, %v875
        %v877 = vpop.f32.mrb[0].mxu0
        %878 = vmatprep.mubr.bf16.mxu0 %v573
        %879 = vmatmul.mubr.bf16.gmra.mrb[0].mxu0 %v367
        %v880 = vpop.f32.mrb[0].mxu0
        %v881 = vadd.f32 %v259, %v880
        %v882 = vpop.f32.mrb[0].mxu0
        %v883 = vpop.f32.mrb[0].mxu0
        %v884 = vadd.f32 %v259, %v883
        %v885 = vpop.f32.mrb[0].mxu0
        %886 = vmatprep.mubr.bf16.mxu0 %v576
        %887 = vmatmul.mubr.bf16.gmra.mrb[0].mxu0 %v369
        %v888 = vpop.f32.mrb[0].mxu0
        %v889 = vadd.f32 %v259, %v888
        %v890 = vpop.f32.mrb[0].mxu0
        %v891 = vpop.f32.mrb[0].mxu0
        %v892 = vadd.f32 %v259, %v891
        %v893 = vpop.f32.mrb[0].mxu0
        %894 = vmatprep.mubr.bf16.mxu0 %v579
        %895 = vmatmul.mubr.bf16.gmra.mrb[0].mxu0 %v371
        %v896 = vpop.f32.mrb[0].mxu0
        %v897 = vadd.f32 %v259, %v896
        %v898 = vpop.f32.mrb[0].mxu0
        %v899 = vpop.f32.mrb[0].mxu0
        %v900 = vadd.f32 %v259, %v899
        %v901 = vpop.f32.mrb[0].mxu0
        %902 = vmatprep.mubr.bf16.mxu0 %v582
        %903 = vmatmul.mubr.bf16.gmra.mrb[0].mxu0 %v373
        %v904 = vpop.f32.mrb[0].mxu0
        %v905 = vadd.f32 %v259, %v904
        %v906 = vpop.f32.mrb[0].mxu0
        %v907 = vpop.f32.mrb[0].mxu0
        %v908 = vadd.f32 %v259, %v907
        %v909 = vpop.f32.mrb[0].mxu0
        %910 = vmatprep.mubr.bf16.mxu0 %v585
        %911 = vmatmul.mubr.bf16.gmra.mrb[0].mxu0 %v375
        %v912 = vpop.f32.mrb[0].mxu0
        %v913 = vadd.f32 %v259, %v912
        %v914 = vpop.f32.mrb[0].mxu0
        %v915 = vpop.f32.mrb[0].mxu0
        %v916 = vadd.f32 %v259, %v915
        %v917 = vpop.f32.mrb[0].mxu0
        %918 = vmatprep.mubr.bf16.mxu0 %v588
        %919 = vmatmul.mubr.bf16.gmra.mrb[0].mxu0 %v377
        %v920 = vpop.f32.mrb[0].mxu0
        %v921 = vadd.f32 %v259, %v920
        %v922 = vpop.f32.mrb[0].mxu0
        %v923 = vpop.f32.mrb[0].mxu0
        %v924 = vadd.f32 %v259, %v923
        %v925 = vpop.f32.mrb[0].mxu0
        %926 = vmatprep.mubr.bf16.mxu0 %v591
        %927 = vmatmul.mubr.bf16.gmra.mrb[0].mxu0 %v379
        %v928 = vpop.f32.mrb[0].mxu0
        %v929 = vadd.f32 %v259, %v928
        %v930 = vpop.f32.mrb[0].mxu0
        %v931 = vpop.f32.mrb[0].mxu0
        %v932 = vadd.f32 %v259, %v931
        %v933 = vpop.f32.mrb[0].mxu0
        %934 = vmatprep.mubr.bf16.mxu0 %v594
        %935 = vmatmul.mubr.bf16.gmra.mrb[0].mxu0 %v381
        %v936 = vpop.f32.mrb[0].mxu0
        %v937 = vadd.f32 %v259, %v936
        %v938 = vpop.f32.mrb[0].mxu0
        %v939 = vpop.f32.mrb[0].mxu0
        %v940 = vadd.f32 %v259, %v939
        %v941 = vpop.f32.mrb[0].mxu0
        %942 = vmatprep.mubr.bf16.mxu0 %v597
        %943 = vmatmul.mubr.bf16.gmra.mrb[0].mxu0 %v383
        %v944 = vpop.f32.mrb[0].mxu0
        %v945 = vadd.f32 %v259, %v944
        %v946 = vpop.f32.mrb[0].mxu0
        %v947 = vpop.f32.mrb[0].mxu0
        %v948 = vadd.f32 %v259, %v947
        %v949 = vpop.f32.mrb[0].mxu0
        %950 = vmatprep.mubr.bf16.mxu0 %v600
        %951 = vmatmul.mubr.bf16.gmra.mrb[0].mxu0 %v385
        %v952 = vpop.f32.mrb[0].mxu0
        %v953 = vadd.f32 %v259, %v952
        %v954 = vpop.f32.mrb[0].mxu0
        %v955 = vpop.f32.mrb[0].mxu0
        %v956 = vadd.f32 %v259, %v955
        %v957 = vpop.f32.mrb[0].mxu0
        %958 = vmatprep.mubr.bf16.mxu0 %v603
        %959 = vmatmul.mubr.bf16.gmra.mrb[0].mxu0 %v387
        %v960 = vpop.f32.mrb[0].mxu0
        %v961 = vadd.f32 %v259, %v960
        %v962 = vpop.f32.mrb[0].mxu0
        %v963 = vpop.f32.mrb[0].mxu0
        %v964 = vadd.f32 %v259, %v963
        %v965 = vpop.f32.mrb[0].mxu0
        %966 = vmatprep.mubr.bf16.mxu0 %v606
        %967 = vmatmul.mubr.bf16.gmra.mrb[0].mxu0 %v389
        %v968 = vpop.f32.mrb[0].mxu0
        %v969 = vadd.f32 %v259, %v968
        %v970 = vpop.f32.mrb[0].mxu0
        %v971 = vpop.f32.mrb[0].mxu0
        %v972 = vadd.f32 %v259, %v971
        %v973 = vpop.f32.mrb[0].mxu0
        %974 = vdwg.mxu0
        %v975 = vmax.f32 %v656, 0.0
        %v976 = vmax.f32 %v658, 0.0
        %v977 = vmax.f32 %v849, 0.0
        %v978 = vmax.f32 %v660, 0.0
        %v979 = vmax.f32 %v662, 0.0
        %v980 = vmax.f32 %v852, 0.0
        %v981 = vmax.f32 %v666, 0.0
        %v982 = vmax.f32 %v668, 0.0
        %v983 = vmax.f32 %v857, 0.0
        %v984 = vmax.f32 %v670, 0.0
        %v985 = vmax.f32 %v672, 0.0
        %v986 = vmax.f32 %v860, 0.0
        %v987 = vmax.f32 %v676, 0.0
        %v988 = vmax.f32 %v678, 0.0
        %v989 = vmax.f32 %v865, 0.0
        %v990 = vmax.f32 %v680, 0.0
        %v991 = vmax.f32 %v682, 0.0
        %v992 = vmax.f32 %v868, 0.0
        %v993 = vmax.f32 %v686, 0.0
        %v994 = vmax.f32 %v688, 0.0
        %v995 = vmax.f32 %v873, 0.0
        %v996 = vmax.f32 %v690, 0.0
        %v997 = vmax.f32 %v692, 0.0
        %v998 = vmax.f32 %v876, 0.0
        %v999 = vmax.f32 %v696, 0.0
        %v1000 = vmax.f32 %v698, 0.0
        %v1001 = vmax.f32 %v881, 0.0
        %v1002 = vmax.f32 %v700, 0.0
        %v1003 = vmax.f32 %v702, 0.0
        %v1004 = vmax.f32 %v884, 0.0
        %v1005 = vmax.f32 %v706, 0.0
        %v1006 = vmax.f32 %v708, 0.0
        %v1007 = vmax.f32 %v889, 0.0
        %v1008 = vmax.f32 %v710, 0.0
        %v1009 = vmax.f32 %v712, 0.0
        %v1010 = vmax.f32 %v892, 0.0
        %v1011 = vmax.f32 %v716, 0.0
        %v1012 = vmax.f32 %v718, 0.0
        %v1013 = vmax.f32 %v897, 0.0
        %v1014 = vmax.f32 %v720, 0.0
        %v1015 = vmax.f32 %v722, 0.0
        %v1016 = vmax.f32 %v900, 0.0
        %v1017 = vmax.f32 %v726, 0.0
        %v1018 = vmax.f32 %v728, 0.0
        %v1019 = vmax.f32 %v905, 0.0
        %v1020 = vmax.f32 %v730, 0.0
        %v1021 = vmax.f32 %v732, 0.0
        %v1022 = vmax.f32 %v908, 0.0
        %v1023 = vmax.f32 %v736, 0.0
        %v1024 = vmax.f32 %v738, 0.0
        %v1025 = vmax.f32 %v913, 0.0
        %v1026 = vmax.f32 %v740, 0.0
        %v1027 = vmax.f32 %v742, 0.0
        %v1028 = vmax.f32 %v916, 0.0
        %v1029 = vmax.f32 %v746, 0.0
        %v1030 = vmax.f32 %v748, 0.0
        %v1031 = vmax.f32 %v921, 0.0
        %v1032 = vmax.f32 %v750, 0.0
        %v1033 = vmax.f32 %v752, 0.0
        %v1034 = vmax.f32 %v924, 0.0
        %v1035 = vmax.f32 %v756, 0.0
        %v1036 = vmax.f32 %v758, 0.0
        %v1037 = vmax.f32 %v929, 0.0
        %v1038 = vmax.f32 %v760, 0.0
        %v1039 = vmax.f32 %v762, 0.0
        %v1040 = vmax.f32 %v932, 0.0
        %v1041 = vmax.f32 %v766, 0.0
        %v1042 = vmax.f32 %v768, 0.0
        %v1043 = vmax.f32 %v937, 0.0
        %v1044 = vmax.f32 %v770, 0.0
        %v1045 = vmax.f32 %v772, 0.0
        %v1046 = vmax.f32 %v940, 0.0
        %v1047 = vmax.f32 %v776, 0.0
        %v1048 = vmax.f32 %v778, 0.0
        %v1049 = vmax.f32 %v945, 0.0
        %v1050 = vmax.f32 %v780, 0.0
        %v1051 = vmax.f32 %v782, 0.0
        %v1052 = vmax.f32 %v948, 0.0
        %v1053 = vmax.f32 %v786, 0.0
        %v1054 = vmax.f32 %v788, 0.0
        %v1055 = vmax.f32 %v953, 0.0
        %v1056 = vmax.f32 %v790, 0.0
        %v1057 = vmax.f32 %v792, 0.0
        %v1058 = vmax.f32 %v956, 0.0
        %v1059 = vmax.f32 %v796, 0.0
        %v1060 = vmax.f32 %v798, 0.0
        %v1061 = vmax.f32 %v961, 0.0
        %v1062 = vmax.f32 %v800, 0.0
        %v1063 = vmax.f32 %v802, 0.0
        %v1064 = vmax.f32 %v964, 0.0
        %v1065 = vmax.f32 %v806, 0.0
        %v1066 = vmax.f32 %v808, 0.0
        %v1067 = vmax.f32 %v969, 0.0
        %v1068 = vmax.f32 %v810, 0.0
        %v1069 = vmax.f32 %v812, 0.0
        %v1070 = vmax.f32 %v972, 0.0
        %1071 = vst [vmem:[%s166] sm:$0xff] %v975
        %1072 = vst [vmem:[%s166 + $0x8] sm:$0xff] %v976
        %1073 = vst [vmem:[%s166 + $0x10] sm:$0xff] %v977
        %1074 = vst [vmem:[%s166 + $0x18] sm:$0xff] %v978
        %1075 = vst [vmem:[%s166 + $0x20] sm:$0xff] %v979
        %1076 = vst [vmem:[%s166 + $0x28] sm:$0xff] %v980
        %1077 = vst [vmem:[%s166 + $0x30] sm:$0xff] %v981
        %1078 = vst [vmem:[%s166 + $0x38] sm:$0xff] %v982
        %1079 = vst [vmem:[%s166 + $0x40] sm:$0xff] %v983
        %1080 = vst [vmem:[%s166 + $0x48] sm:$0xff] %v984
        %1081 = vst [vmem:[%s166 + $0x50] sm:$0xff] %v985
        %1082 = vst [vmem:[%s166 + $0x58] sm:$0xff] %v986
        %1083 = vst [vmem:[%s166 + $0x60] sm:$0xff] %v987
        %1084 = vst [vmem:[%s166 + $0x68] sm:$0xff] %v988
        %1085 = vst [vmem:[%s166 + $0x70] sm:$0xff] %v989
        %1086 = vst [vmem:[%s166 + $0x78] sm:$0xff] %v990
        %1087 = vst [vmem:[%s166 + $0x80] sm:$0xff] %v991
        %1088 = vst [vmem:[%s166 + $0x88] sm:$0xff] %v992
        %1089 = vst [vmem:[%s166 + $0x90] sm:$0xff] %v993
        %1090 = vst [vmem:[%s166 + $0x98] sm:$0xff] %v994
        %1091 = vst [vmem:[%s166 + $0xa0] sm:$0xff] %v995
        %1092 = vst [vmem:[%s166 + $0xa8] sm:$0xff] %v996
        %1093 = vst [vmem:[%s166 + $0xb0] sm:$0xff] %v997
        %1094 = vst [vmem:[%s166 + $0xb8] sm:$0xff] %v998
        %1095 = vst [vmem:[%s166 + $0xc0] sm:$0xff] %v999
        %1096 = vst [vmem:[%s166 + $0xc8] sm:$0xff] %v1000
        %1097 = vst [vmem:[%s166 + $0xd0] sm:$0xff] %v1001
        %1098 = vst [vmem:[%s166 + $0xd8] sm:$0xff] %v1002
        %1099 = vst [vmem:[%s166 + $0xe0] sm:$0xff] %v1003
        %1100 = vst [vmem:[%s166 + $0xe8] sm:$0xff] %v1004
        %1101 = vst [vmem:[%s166 + $0xf0] sm:$0xff] %v1005
        %1102 = vst [vmem:[%s166 + $0xf8] sm:$0xff] %v1006
        %1103 = vst [vmem:[%s166 + $0x100] sm:$0xff] %v1007
        %1104 = vst [vmem:[%s166 + $0x108] sm:$0xff] %v1008
        %1105 = vst [vmem:[%s166 + $0x110] sm:$0xff] %v1009
        %1106 = vst [vmem:[%s166 + $0x118] sm:$0xff] %v1010
        %1107 = vst [vmem:[%s166 + $0x120] sm:$0xff] %v1011
        %1108 = vst [vmem:[%s166 + $0x128] sm:$0xff] %v1012
        %1109 = vst [vmem:[%s166 + $0x130] sm:$0xff] %v1013
        %1110 = vst [vmem:[%s166 + $0x138] sm:$0xff] %v1014
        %1111 = vst [vmem:[%s166 + $0x140] sm:$0xff] %v1015
        %1112 = vst [vmem:[%s166 + $0x148] sm:$0xff] %v1016
        %1113 = vst [vmem:[%s166 + $0x150] sm:$0xff] %v1017
        %1114 = vst [vmem:[%s166 + $0x158] sm:$0xff] %v1018
        %1115 = vst [vmem:[%s166 + $0x160] sm:$0xff] %v1019
        %1116 = vst [vmem:[%s166 + $0x168] sm:$0xff] %v1020
        %1117 = vst [vmem:[%s166 + $0x170] sm:$0xff] %v1021
        %1118 = vst [vmem:[%s166 + $0x178] sm:$0xff] %v1022
        %1119 = vst [vmem:[%s166 + $0x180] sm:$0xff] %v1023
        %1120 = vst [vmem:[%s166 + $0x188] sm:$0xff] %v1024
        %1121 = vst [vmem:[%s166 + $0x190] sm:$0xff] %v1025
        %1122 = vst [vmem:[%s166 + $0x198] sm:$0xff] %v1026
        %1123 = vst [vmem:[%s166 + $0x1a0] sm:$0xff] %v1027
        %1124 = vst [vmem:[%s166 + $0x1a8] sm:$0xff] %v1028
        %1125 = vst [vmem:[%s166 + $0x1b0] sm:$0xff] %v1029
        %1126 = vst [vmem:[%s166 + $0x1b8] sm:$0xff] %v1030
        %1127 = vst [vmem:[%s166 + $0x1c0] sm:$0xff] %v1031
        %1128 = vst [vmem:[%s166 + $0x1c8] sm:$0xff] %v1032
        %1129 = vst [vmem:[%s166 + $0x1d0] sm:$0xff] %v1033
        %1130 = vst [vmem:[%s166 + $0x1d8] sm:$0xff] %v1034
        %1131 = vst [vmem:[%s166 + $0x1e0] sm:$0xff] %v1035
        %1132 = vst [vmem:[%s166 + $0x1e8] sm:$0xff] %v1036
        %1133 = vst [vmem:[%s166 + $0x1f0] sm:$0xff] %v1037
        %1134 = vst [vmem:[%s166 + $0x1f8] sm:$0xff] %v1038
        %1135 = vst [vmem:[%s166 + $0x200] sm:$0xff] %v1039
        %1136 = vst [vmem:[%s166 + $0x208] sm:$0xff] %v1040
        %1137 = vst [vmem:[%s166 + $0x210] sm:$0xff] %v1041
        %1138 = vst [vmem:[%s166 + $0x218] sm:$0xff] %v1042
        %1139 = vst [vmem:[%s166 + $0x220] sm:$0xff] %v1043
        %1140 = vst [vmem:[%s166 + $0x228] sm:$0xff] %v1044
        %1141 = vst [vmem:[%s166 + $0x230] sm:$0xff] %v1045
        %1142 = vst [vmem:[%s166 + $0x238] sm:$0xff] %v1046
        %1143 = vst [vmem:[%s166 + $0x240] sm:$0xff] %v1047
        %1144 = vst [vmem:[%s166 + $0x248] sm:$0xff] %v1048
        %1145 = vst [vmem:[%s166 + $0x250] sm:$0xff] %v1049
        %1146 = vst [vmem:[%s166 + $0x258] sm:$0xff] %v1050
        %1147 = vst [vmem:[%s166 + $0x260] sm:$0xff] %v1051
        %1148 = vst [vmem:[%s166 + $0x268] sm:$0xff] %v1052
        %1149 = vst [vmem:[%s166 + $0x270] sm:$0xff] %v1053
        %1150 = vst [vmem:[%s166 + $0x278] sm:$0xff] %v1054
        %1151 = vst [vmem:[%s166 + $0x280] sm:$0xff] %v1055
        %1152 = vst [vmem:[%s166 + $0x288] sm:$0xff] %v1056
        %1153 = vst [vmem:[%s166 + $0x290] sm:$0xff] %v1057
        %1154 = vst [vmem:[%s166 + $0x298] sm:$0xff] %v1058
        %1155 = vst [vmem:[%s166 + $0x2a0] sm:$0xff] %v1059
        %1156 = vst [vmem:[%s166 + $0x2a8] sm:$0xff] %v1060
        %1157 = vst [vmem:[%s166 + $0x2b0] sm:$0xff] %v1061
        %1158 = vst [vmem:[%s166 + $0x2b8] sm:$0xff] %v1062
        %1159 = vst [vmem:[%s166 + $0x2c0] sm:$0xff] %v1063
        %1160 = vst [vmem:[%s166 + $0x2c8] sm:$0xff] %v1064
        %1161 = vst [vmem:[%s166 + $0x2d0] sm:$0xff] %v1065
        %1162 = vst [vmem:[%s166 + $0x2d8] sm:$0xff] %v1066
        %1163 = vst [vmem:[%s166 + $0x2e0] sm:$0xff] %v1067
        %1164 = vst [vmem:[%s166 + $0x2e8] sm:$0xff] %v1068
        %1165 = vst [vmem:[%s166 + $0x2f0] sm:$0xff] %v1069
        %1166 = vst [vmem:[%s166 + $0x2f8] sm:$0xff] %v1070
        %s1167 = sand.u32 %s93, 1
        %s1168 = scalar_lea.sflag [#allocation3], %s1167
        %s1169 = sand.u32 %s93, 1
        %s1170 = smul.addr %s1169, 768
        %s1171 = scalar_lea.vmem [#allocation2], %s1170
        // Predicated region
        $region33: #{_lambda_.1} parent=31 // pred_check
          %p1172 = pneg %p103
        $region34: #{_lambda_.1} parent=31 // pred_check_branch
          %1174 = sbr.rel (%p1172) target = $region36
        $region35: #{_lambda_.1} parent=31 // pred_region
          %s1175 = smul.u32 32, %s17
          %s1177 = ssub.s32 12288, 12288
          %1178 = vsyncadd %s1168, %s1177
          %s1179 = smul.addr %s1175, 3
          %s1180 = smul.addr %s1179, 128
          %s1181 = scalar_lea.hbm %s3, %s1180
          %s1182 = sshll.u32 %s1171, 4
          %s1183 = int_to_ptr.vmem [resolvable:$true] %s1182
          %1188 = dma.vmem_to_hbm [thread:$0]  %s1183, 12288, %s1181, %s1168, 384, 384, 24
        $region36: #{_lambda_.1} parent=31 // pred_fallthru
          _
      $region32: #{_lambda_.1} parent=5 // pred_fallthru
        _
      %p1189 = scmp.le.s32.totalorder 2, %s12
      // Predicated region
      $region37: #{_lambda_.1} parent=5 // pred_check
        %p1190 = pneg %p1189
      $region38: #{_lambda_.1} parent=5 // pred_check_branch
        %1192 = sbr.rel (%p1190) target = $region40
      $region39: #{_lambda_.1} parent=5 // pred_region
        %s1193 = ssub.s32 %s12, 2
        // Predicated region
        $region41: #{_lambda_.1} parent=39 // pred_check
          %p1194 = pneg %p109
        $region42: #{_lambda_.1} parent=39 // pred_check_branch
          %1196 = sbr.rel (%p1194) target = $region44
        $region43: #{_lambda_.1} parent=39 // pred_region
          %s1197 = sand.u32 %s94, 1
          %s1198 = scalar_lea.sflag [#allocation3], %s1197
          %s1199 = sand.u32 %s94, 1
          %s1200 = smul.addr %s1199, 768
          %s1201 = scalar_lea.vmem [#allocation2], %s1200
          %1202 = dma.done %s1198, 12288
        $region44: #{_lambda_.1} parent=39 // pred_fallthru
          _
      $region40: #{_lambda_.1} parent=5 // pred_fallthru
        _
    $region6: #{_lambda_.1} parent=1 // loop_footer
      %s16 = sadd.s32 1, %s12
    $region7: #{_lambda_.1} parent=1 // loop_footer_branch
      %11 = sbr.rel target = $region3
    $region8: #{_lambda_.1} parent=1 // loop_exit
      _
    %1203 = vsyncpa [#allocation3], 1
    %s1204 = scalar_lea.sflag [#allocation3], 1
    %1205 = vsyncpa %s1204, 1

</llo_original>
